<compile_context>
chip_gen: v6e
topology: v6e:2x2x1
jax: 0.10.0
libtpu: 0.0.40
codegen_flags: <defaults>
</compile_context>

<pallas_src>
import functools
import math
from typing import NamedTuple

import jax
import jax.numpy as jnp
from jax.experimental import pallas as pl
from jax.experimental.pallas import tpu as pltpu

VMEM_LIMIT = 48 * 1024 * 1024  # safe on v5e/v6e (128 MiB) and under v7x's 64 MiB


# ----------------------------------------------------------------------------
# Tiling helper
# ----------------------------------------------------------------------------
def _pick_tile(full, pref, align):
    """Largest aligned tile <= pref that evenly divides `full` (else full)."""
    if full <= pref:
        return full
    t = (pref // align) * align
    while t >= align:
        if full % t == 0:
            return t
        t -= align
    return full


# ----------------------------------------------------------------------------
# Fused linear (+bias, optional ReLU) kernel:  o = act(x @ w + b)
# ----------------------------------------------------------------------------
def _linear_kernel(x_ref, w_ref, b_ref, o_ref, acc_ref, *, activation):
    k = pl.program_id(2)

    @pl.when(k == 0)
    def _():
        acc_ref[...] = jnp.zeros_like(acc_ref)

    acc_ref[...] += jnp.dot(x_ref[...], w_ref[...],
                            preferred_element_type=jnp.float32)

    @pl.when(k == pl.num_programs(2) - 1)
    def _():
        out = acc_ref[...] + b_ref[...].astype(jnp.float32)
        if activation == "relu":
            out = jnp.maximum(out, 0.0)
        o_ref[...] = out.astype(o_ref.dtype)


def linear(x, w, b, activation=None, *, tm=256, tn=256, tk=512):
    """x:(M,K), w:(K,N), b:(N,) -> act(x @ w + b), tiled + pipelined, bf16/MXU."""
    M, K = x.shape
    N = w.shape[1]
    tm = _pick_tile(M, tm, 8)
    tn = _pick_tile(N, tn, 128)
    tk = _pick_tile(K, tk, 128)
    grid = (M // tm, N // tn, K // tk)
    kernel = functools.partial(_linear_kernel, activation=activation)
    return pl.pallas_call(
        kernel,
        out_shape=jax.ShapeDtypeStruct((M, N), x.dtype),
        grid=grid,
        in_specs=[
            pl.BlockSpec((tm, tk), lambda i, j, k: (i, k)),
            pl.BlockSpec((tk, tn), lambda i, j, k: (k, j)),
            pl.BlockSpec((1, tn), lambda i, j, k: (0, j)),
        ],
        out_specs=pl.BlockSpec((tm, tn), lambda i, j, k: (i, j)),
        scratch_shapes=[pltpu.VMEM((tm, tn), jnp.float32)],
        compiler_params=pltpu.CompilerParams(
            dimension_semantics=("parallel", "parallel", "arbitrary"),
            vmem_limit_bytes=VMEM_LIMIT),
    )(x, w, b.reshape(1, N))


# ----------------------------------------------------------------------------
# Fused residual-add + LayerNorm kernel (single-pass sum / sum-of-squares)
# ----------------------------------------------------------------------------
def _add_layernorm_kernel(x_ref, r_ref, g_ref, b_ref, o_ref):
    x = x_ref[...].astype(jnp.float32) + r_ref[...].astype(jnp.float32)
    inv_d = 1.0 / x.shape[-1]
    s1 = jnp.sum(x, axis=-1, keepdims=True)
    s2 = jnp.sum(x * x, axis=-1, keepdims=True)
    mean = s1 * inv_d
    var = s2 * inv_d - mean * mean
    y = (x - mean) * jax.lax.rsqrt(var + 1e-5)
    o_ref[...] = (y * g_ref[...].astype(jnp.float32)
                  + b_ref[...].astype(jnp.float32)).astype(o_ref.dtype)


def add_layernorm(x, res, gamma, beta, *, tm=1024):
    """LayerNorm(x + res) over last axis (eps=1e-5, like nn.LayerNorm)."""
    M, D = x.shape
    tm = _pick_tile(M, tm, 8)
    grid = (M // tm,)
    return pl.pallas_call(
        _add_layernorm_kernel,
        out_shape=jax.ShapeDtypeStruct((M, D), x.dtype),
        grid=grid,
        in_specs=[
            pl.BlockSpec((tm, D), lambda i: (i, 0)),
            pl.BlockSpec((tm, D), lambda i: (i, 0)),
            pl.BlockSpec((1, D), lambda i: (0, 0)),
            pl.BlockSpec((1, D), lambda i: (0, 0)),
        ],
        out_specs=pl.BlockSpec((tm, D), lambda i: (i, 0)),
        compiler_params=pltpu.CompilerParams(
            dimension_semantics=("parallel",),
            vmem_limit_bytes=VMEM_LIMIT),
    )(x, res, gamma.reshape(1, D), beta.reshape(1, D))


# ----------------------------------------------------------------------------
# Flash attention kernel (causal + padding mask, online softmax).
# grid = (B, H, S//tq, S//tk); kv axis is the innermost "arbitrary" reduction.
# 1/sqrt(Dh) is already folded into the Q projection weights.
# ----------------------------------------------------------------------------
def _flash_attn_kernel(q_ref, k_ref, v_ref, pad_ref, o_ref,
                       m_sc, l_sc, acc_sc, *, tq, tk):
    qi = pl.program_id(2)
    ki = pl.program_id(3)

    @pl.when(ki == 0)
    def _():
        m_sc[...] = jnp.full_like(m_sc, -jnp.inf)
        l_sc[...] = jnp.zeros_like(l_sc)
        acc_sc[...] = jnp.zeros_like(acc_sc)

    # Skip kv tiles that lie entirely above the causal diagonal.
    causal_live = (ki * tk) <= (qi * tq + tq - 1)

    @pl.when(causal_live)
    def _():
        q = q_ref[0, 0]                      # (tq, Dh) bf16, scale pre-folded
        k = k_ref[0, 0]                      # (tk, Dh) bf16
        v = v_ref[0, 0]                      # (tk, Dh) bf16
        s = jax.lax.dot_general(q, k, (((1,), (1,)), ((), ())),
                                preferred_element_type=jnp.float32)  # (tq, tk)

        row = qi * tq + jax.lax.broadcasted_iota(jnp.int32, (tq, tk), 0)
        col = ki * tk + jax.lax.broadcasted_iota(jnp.int32, (tq, tk), 1)
        visible = jnp.logical_and(col <= row, pad_ref[0] > 0.0)       # (tq, tk)
        s = jnp.where(visible, s, -1e9)

        m_prev = m_sc[...]
        m_new = jnp.maximum(m_prev, s.max(axis=-1, keepdims=True))
        a = jnp.exp(m_prev - m_new)
        p = jnp.exp(s - m_new)
        l_sc[...] = a * l_sc[...] + p.sum(axis=-1, keepdims=True)
        acc_sc[...] = a * acc_sc[...] + jax.lax.dot_general(
            p.astype(v.dtype), v, (((1,), (0,)), ((), ())),
            preferred_element_type=jnp.float32)
        m_sc[...] = m_new

    @pl.when(ki == pl.num_programs(3) - 1)
    def _():
        denom = jnp.maximum(l_sc[...], 1e-20)        # guard fully-masked rows
        o_ref[0, 0] = (acc_sc[...]
                       * pl.reciprocal(denom, approx=True)).astype(o_ref.dtype)


def flash_attention(q, k, v, pad, *, tq=256, tk=256):
    """q,k,v:(B,H,S,Dh) bf16, pad:(B,1,S) f32 {0,1} -> context (B,H,S,Dh)."""
    B, H, S, Dh = q.shape
    tq = _pick_tile(S, tq, 8)
    tk = _pick_tile(S, tk, 128)      # 128-aligned keeps the pad tile lane-legal
    grid = (B, H, S // tq, S // tk)
    kernel = functools.partial(_flash_attn_kernel, tq=tq, tk=tk)
    return pl.pallas_call(
        kernel,
        out_shape=jax.ShapeDtypeStruct((B, H, S, Dh), q.dtype),
        grid=grid,
        in_specs=[
            pl.BlockSpec((1, 1, tq, Dh), lambda b, h, qi, ki: (b, h, qi, 0)),
            pl.BlockSpec((1, 1, tk, Dh), lambda b, h, qi, ki: (b, h, ki, 0)),
            pl.BlockSpec((1, 1, tk, Dh), lambda b, h, qi, ki: (b, h, ki, 0)),
            pl.BlockSpec((1, 1, tk), lambda b, h, qi, ki: (b, 0, ki)),
        ],
        out_specs=pl.BlockSpec((1, 1, tq, Dh), lambda b, h, qi, ki: (b, h, qi, 0)),
        scratch_shapes=[
            pltpu.VMEM((tq, 1), jnp.float32),   # m
            pltpu.VMEM((tq, 1), jnp.float32),   # l
            pltpu.VMEM((tq, Dh), jnp.float32),  # acc
        ],
        compiler_params=pltpu.CompilerParams(
            dimension_semantics=("parallel", "parallel", "parallel", "arbitrary"),
            vmem_limit_bytes=VMEM_LIMIT),
    )(q, k, v, pad)


# ----------------------------------------------------------------------------
# Model glue (parameter setup, reshapes, composition)
# ----------------------------------------------------------------------------
class SegmentOutput(NamedTuple):
    logits: jnp.ndarray
    embeds: jnp.ndarray
    decoder_hidden: jnp.ndarray


def sinusoidal_pe(max_len, d_model):
    pos = jnp.arange(max_len, dtype=jnp.float32)[:, None]
    div = jnp.exp(jnp.arange(0, d_model, 2, dtype=jnp.float32)
                  * (-math.log(10000.0) / d_model))
    pe = jnp.zeros((max_len, d_model), dtype=jnp.float32)
    pe = pe.at[:, 0::2].set(jnp.sin(pos * div))
    pe = pe.at[:, 1::2].set(jnp.cos(pos * div)[:, : d_model // 2])  # odd-D safe
    return pe


def init_params(key, vocab_size, d_model, d_ff, n_layers, n_heads, pad_id,
                dtype=jnp.bfloat16):
    keys = jax.random.split(key, 2 + n_layers)
    scale = 0.02
    dh = d_model // n_heads
    q_scale = 1.0 / math.sqrt(dh)     # attention scale folded into Q projection

    emb = jax.random.normal(keys[0], (vocab_size, d_model), jnp.float32) * scale
    emb = emb.at[pad_id].set(0.0)     # padding_idx row zeroed (nn.Embedding)
    params = {
        "embedding": emb.astype(dtype),
        "embedding_t": emb.T.astype(dtype),   # pre-transposed once for emb2vocab
        "emb2vocab_b": jnp.zeros((vocab_size,), dtype),
        "layers": [],
    }
    for l in range(n_layers):
        lk = jax.random.split(keys[2 + l], 8)
        wq = jax.random.normal(lk[0], (d_model, d_model), jnp.float32) * scale
        wk = jax.random.normal(lk[1], (d_model, d_model), jnp.float32) * scale
        wv = jax.random.normal(lk[2], (d_model, d_model), jnp.float32) * scale
        layer = {
            # fused (D, 3D) QKV projection; 1/sqrt(Dh) folded into the Q slice
            "wqkv": jnp.concatenate([wq * q_scale, wk, wv], axis=1).astype(dtype),
            "bqkv": jnp.zeros((3 * d_model,), dtype),
            "wo": (jax.random.normal(lk[3], (d_model, d_model), jnp.float32)
                   * scale).astype(dtype),
            "bo": jnp.zeros((d_model,), dtype),
            "w_ff1": (jax.random.normal(lk[4], (d_model, d_ff), jnp.float32)
                      * scale).astype(dtype),
            "b_ff1": jnp.zeros((d_ff,), dtype),
            "w_ff2": (jax.random.normal(lk[5], (d_ff, d_model), jnp.float32)
                      * scale).astype(dtype),
            "b_ff2": jnp.zeros((d_model,), dtype),
            "ln1_g": jnp.ones((d_model,), dtype),
            "ln1_b": jnp.zeros((d_model,), dtype),
            "ln2_g": jnp.ones((d_model,), dtype),
            "ln2_b": jnp.zeros((d_model,), dtype),
        }
        params["layers"].append(layer)
    return params


def mha_block(x2d, layer, pad, B, S, n_heads):
    D = x2d.shape[-1]
    Dh = D // n_heads
    qkv = linear(x2d, layer["wqkv"], layer["bqkv"])              # (B*S, 3D)
    # head-aligned layout for the attention kernel: (3, B, H, S, Dh)
    qkv = qkv.reshape(B, S, 3, n_heads, Dh).transpose(2, 0, 3, 1, 4)
    ctx = flash_attention(qkv[0], qkv[1], qkv[2], pad)           # (B, H, S, Dh)
    ctx = ctx.transpose(0, 2, 1, 3).reshape(B * S, D)            # (B*S, D)
    return linear(ctx, layer["wo"], layer["bo"])


def decoder_layer(x2d, layer, pad, B, S, n_heads):
    attn = mha_block(x2d, layer, pad, B, S, n_heads)
    x2d = add_layernorm(attn, x2d, layer["ln1_g"], layer["ln1_b"])
    ff = linear(x2d, layer["w_ff1"], layer["b_ff1"], activation="relu")
    ff = linear(ff, layer["w_ff2"], layer["b_ff2"])
    x2d = add_layernorm(ff, x2d, layer["ln2_g"], layer["ln2_b"])
    return x2d


def segment_transformer_encoder(params, x, *, n_heads, pad_id, max_len):
    B, S = x.shape
    d_model = params["embedding"].shape[1]

    # --- SegEmbedding.forward: embedding lookup + positional encoding (glue) ---
    embeds = jnp.take(params["embedding"], x, axis=0).astype(jnp.float32)
    embeds = (embeds + sinusoidal_pe(max_len, d_model)[None, :S, :]
              ).astype(params["embedding"].dtype)                 # (B,S,D) bf16

    # --- pad validity vector (causal mask is built in-kernel) ---
    pad = (x != pad_id).astype(jnp.float32).reshape(B, 1, S)       # (B,1,S)

    # --- Decoder (used as encoder): stack of transformer blocks ---
    h = embeds.reshape(B * S, d_model)
    for layer in params["layers"]:
        h = decoder_layer(h, layer, pad, B, S, n_heads)
    hidden = h.reshape(B, S, d_model)

    # --- emb2vocab: weight tied; project all B*S rows (tile-divisible M),
    #     drop the last position AFTER the matmul ---
    logits_full = linear(h, params["embedding_t"], params["emb2vocab_b"])
    logits = logits_full.reshape(B, S, -1)[:, :-1, :]

    return SegmentOutput(logits=logits, embeds=embeds, decoder_hidden=hidden)


# ----------------------------------------------------------------------------
if __name__ == "__main__":
    # Small config consistent with the module's constructor arguments.
    vocab_size = 16
    d_model = 32
    d_ff = 64
    n_layers = 2
    n_heads = 4
    pad_id = 0
    max_len = 16
    B, S = 2, 8

    key = jax.random.PRNGKey(0)
    pkey, xkey = jax.random.split(key)
    params = init_params(pkey, vocab_size, d_model, d_ff, n_layers, n_heads,
                         pad_id)

    # Integer token ids, with some trailing padding in the second sequence.
    x = jax.random.randint(xkey, (B, S), 1, vocab_size, dtype=jnp.int32)
    x = x.at[1, -2:].set(pad_id)

    out = segment_transformer_encoder(params, x, n_heads=n_heads,
                                      pad_id=pad_id, max_len=max_len)
    jax.block_until_ready(out)

    assert out.logits.shape == (B, S - 1, vocab_size)
    assert out.embeds.shape == (B, S, d_model)
    assert out.decoder_hidden.shape == (B, S, d_model)
    assert jnp.all(jnp.isfinite(out.logits.astype(jnp.float32)))
    assert jnp.all(jnp.isfinite(out.decoder_hidden.astype(jnp.float32)))
    print("KERNEL_OK")
</pallas_src>

<mosaic_0001>
module attributes {stable_mosaic.version = 11 : i64} {
  func.func @_linear_kernel(%arg0: i32, %arg1: i32, %arg2: i32, %arg3: memref<16x32xbf16, #tpu.memory_space<vmem>>, %arg4: memref<32x96xbf16, #tpu.memory_space<vmem>>, %arg5: memref<1x96xbf16, #tpu.memory_space<vmem>>, %arg6: memref<16x96xbf16, #tpu.memory_space<vmem>>, %arg7: memref<16x96xf32, #tpu.memory_space<vmem>>) attributes {dimension_semantics = [#tpu.dimension_semantics<parallel>, #tpu.dimension_semantics<parallel>, #tpu.dimension_semantics<arbitrary>], iteration_bounds = array<i64: 1, 1, 1>, scalar_prefetch = 0 : i64, scratch_operands = 1 : i64, tpu.core_type = #tpu.core_type<tc>, window_params = [{transform_indices = @transform_0, window_bounds = array<i64: 16, 32>}, {transform_indices = @transform_1, window_bounds = array<i64: 32, 96>}, {transform_indices = @transform_2, window_bounds = array<i64: 1, 96>}, {transform_indices = @transform_3, window_bounds = array<i64: 16, 96>}]} {
    %c0_i32 = arith.constant 0 : i32
    %0 = arith.cmpi eq, %arg2, %c0_i32 : i32
    %1 = arith.extui %0 : i1 to i32
    %c0_i32_0 = arith.constant 0 : i32
    %2 = arith.cmpi ne, %1, %c0_i32_0 : i32
    scf.if %2 {
      %cst_10 = arith.constant 0.000000e+00 : f32
      %12 = vector.broadcast %cst_10 : f32 to vector<16x96xf32>
      %c0_11 = arith.constant 0 : index
      %c0_12 = arith.constant 0 : index
      %13 = vector.load %arg7[%c0_11, %c0_12] : memref<16x96xf32, #tpu.memory_space<vmem>>, vector<16x96xf32>
      tpu.vector_store %arg7[%c0_11, %c0_12], %12 {strides = array<i32>} : memref<16x96xf32, #tpu.memory_space<vmem>>, vector<16x96xf32>,
    } else {
    }
    %c0 = arith.constant 0 : index
    %c0_1 = arith.constant 0 : index
    %3 = vector.load %arg7[%c0, %c0_1] : memref<16x96xf32, #tpu.memory_space<vmem>>, vector<16x96xf32>
    %c0_2 = arith.constant 0 : index
    %c0_3 = arith.constant 0 : index
    %4 = vector.load %arg3[%c0_2, %c0_3] : memref<16x32xbf16, #tpu.memory_space<vmem>>, vector<16x32xbf16>
    %c0_4 = arith.constant 0 : index
    %c0_5 = arith.constant 0 : index
    %5 = vector.load %arg4[%c0_4, %c0_5] : memref<32x96xbf16, #tpu.memory_space<vmem>>, vector<32x96xbf16>
    %cst = arith.constant dense<0.000000e+00> : vector<16x96xf32>
    %6 = tpu.matmul %4, %5, %cst {dimension_numbers = #tpu.dot_dimension_numbers<[1], [0], [0], [1], [0, 0, 1, 1], [], []>} : vector<16x32xbf16>, vector<32x96xbf16>, vector<16x96xf32> -> vector<16x96xf32>
    %7 = arith.addf %3, %6 : vector<16x96xf32>
    %c0_6 = arith.constant 0 : index
    %c0_7 = arith.constant 0 : index
    %8 = vector.load %arg7[%c0_6, %c0_7] : memref<16x96xf32, #tpu.memory_space<vmem>>, vector<16x96xf32>
    tpu.vector_store %arg7[%c0_6, %c0_7], %7 {strides = array<i32>} : memref<16x96xf32, #tpu.memory_space<vmem>>, vector<16x96xf32>,
    %c0_i32_8 = arith.constant 0 : i32
    %9 = arith.cmpi eq, %arg2, %c0_i32_8 : i32
    %10 = arith.extui %9 : i1 to i32
    %c0_i32_9 = arith.constant 0 : i32
    %11 = arith.cmpi ne, %10, %c0_i32_9 : i32
    scf.if %11 {
      %c0_10 = arith.constant 0 : index
      %c0_11 = arith.constant 0 : index
      %12 = vector.load %arg7[%c0_10, %c0_11] : memref<16x96xf32, #tpu.memory_space<vmem>>, vector<16x96xf32>
      %c0_12 = arith.constant 0 : index
      %c0_13 = arith.constant 0 : index
      %13 = vector.load %arg5[%c0_12, %c0_13] : memref<1x96xbf16, #tpu.memory_space<vmem>>, vector<1x96xbf16>
      %14 = arith.extf %13 : vector<1x96xbf16> to vector<1x96xf32>
      %15 = vector.broadcast %14 : vector<1x96xf32> to vector<16x96xf32>
      %16 = arith.addf %12, %15 : vector<16x96xf32>
      %17 = arith.truncf %16 : vector<16x96xf32> to vector<16x96xbf16>
      %c0_14 = arith.constant 0 : index
      %c0_15 = arith.constant 0 : index
      %18 = vector.load %arg6[%c0_14, %c0_15] : memref<16x96xbf16, #tpu.memory_space<vmem>>, vector<16x96xbf16>
      tpu.vector_store %arg6[%c0_14, %c0_15], %17 {strides = array<i32>} : memref<16x96xbf16, #tpu.memory_space<vmem>>, vector<16x96xbf16>,
    } else {
    }
    return
  }
  func.func @transform_0(%arg0: i32, %arg1: i32, %arg2: i32) -> (i32, i32) {
    %c0_i32 = arith.constant 0 : i32
    return %arg0, %arg2 : i32, i32
  }
  func.func @transform_1(%arg0: i32, %arg1: i32, %arg2: i32) -> (i32, i32) {
    %c0_i32 = arith.constant 0 : i32
    return %arg2, %arg1 : i32, i32
  }
  func.func @transform_2(%arg0: i32, %arg1: i32, %arg2: i32) -> (i32, i32) {
    %c0_i32 = arith.constant 0 : i32
    %c0_i32_0 = arith.constant 0 : i32
    return %c0_i32, %arg1 : i32, i32
  }
  func.func @transform_3(%arg0: i32, %arg1: i32, %arg2: i32) -> (i32, i32) {
    %c0_i32 = arith.constant 0 : i32
    return %arg0, %arg1 : i32, i32
  }
}

</mosaic_0001>

<llo_original>
// kernel: tpu_custom_call.1
$region0: #{tpu_custom_call.1}
  #allocation0 [shape = 'u32[]', space=smem, size = 0x4, offset = 0x4, fixed_abs, tag = 'smem constant byte address 0x4 - core index']
  #allocation1 [shape = 'u32[144,128]{1,0:T(1,128)}', space=vmem, size = 0x12000, scoped, tag = 'internal scratch']
  #allocation2 [shape = 'f32[16,96]{1,0:T(8,128)}', space=vmem, size = 0x2000, scoped, tag = 'scratch operand']
  %s0 = inlined_call_operand.hbm [shape: bf16[16,32], index: 0, kind: input, shape index: {}]
  %s1 = inlined_call_operand.hbm [shape: bf16[32,96], index: 1, kind: input, shape index: {}]
  %s2 = inlined_call_operand.vmem [shape: bf16[1,96], index: 2, kind: input, shape index: {}]
  %s3 = inlined_call_operand.hbm [shape: bf16[16,96], index: 3, kind: output, shape index: {}]
  %s4 = sld [smem:[#allocation0]]
  $region38: #{tpu_custom_call.1} parent=0
    _
  %s6 = ssub.s32 1, %s4
  %s7 = scalar_select 0, %s6, %s4
  $region1: #{tpu_custom_call.1} parent=0
    #allocation3 [shape = 'u8[4096]{0}', space=vmem, size = 0x1000, scoped, tag = 'input window, operand 0, single buffered']
    #allocation4 [shape = 's32[1]{0}', space=sflag, size = 0x4, scoped, tag = 'scoped memory for tpu_custom_call.1']
    #allocation5 [shape = 's32[1]{0}', space=sflag, size = 0x4, scoped, tag = 'scoped memory for tpu_custom_call.1']
    #allocation6 [shape = 'u8[8192]{0}', space=vmem, size = 0x2000, scoped, tag = 'input window, operand 1, single buffered']
    #allocation7 [shape = 's32[1]{0}', space=sflag, size = 0x4, scoped, tag = 'scoped memory for tpu_custom_call.1']
    #allocation8 [shape = 'u8[4096]{0}', space=vmem, size = 0x1000, scoped, tag = 'output window, operand 0, single buffered']
    %8 = vsyncpa [#allocation4], 0
    %9 = vsyncpa [#allocation7], 0
    %10 = vsyncpa [#allocation5], 0
    // Predicated region
    $region2: #{tpu_custom_call.1} parent=1 // pred_check
      _
    $region3: #{tpu_custom_call.1} parent=1 // pred_check_branch
      %12 = sbr.rel (0) target = $region5
    $region4: #{tpu_custom_call.1} parent=1 // pred_region
      %s14 = ssub.s32 128, 128
      %15 = vsyncadd [#allocation4], %s14
      %s16 = sshll.u32 [#allocation3], 4
      %s17 = int_to_ptr.vmem [resolvable:$true] %s16
      %22 = dma.hbm_to_vmem [thread:$0]  %s0, 128, %s17, [#allocation4], 64, 64, 4
    $region5: #{tpu_custom_call.1} parent=1 // pred_fallthru
      _
    // Predicated region
    $region6: #{tpu_custom_call.1} parent=1 // pred_check
      _
    $region7: #{tpu_custom_call.1} parent=1 // pred_check_branch
      %24 = sbr.rel (0) target = $region9
    $region8: #{tpu_custom_call.1} parent=1 // pred_region
      %s26 = ssub.s32 256, 256
      %27 = vsyncadd [#allocation7], %s26
      %s28 = sshll.u32 [#allocation6], 4
      %s29 = int_to_ptr.vmem [resolvable:$true] %s28
      %34 = dma.hbm_to_vmem [thread:$0]  %s1, 256, %s29, [#allocation7], 64, 64, 4
    $region9: #{tpu_custom_call.1} parent=1 // pred_fallthru
      _
    // Predicated region
    $region10: #{tpu_custom_call.1} parent=1 // pred_check
      _
    $region11: #{tpu_custom_call.1} parent=1 // pred_check_branch
      %36 = sbr.rel (0) target = $region13
    $region12: #{tpu_custom_call.1} parent=1 // pred_region
      _
    $region13: #{tpu_custom_call.1} parent=1 // pred_fallthru
      _
    // Predicated region
    $region14: #{tpu_custom_call.1} parent=1 // pred_check
      _
    $region15: #{tpu_custom_call.1} parent=1 // pred_check_branch
      %38 = sbr.rel (0) target = $region17
    $region16: #{tpu_custom_call.1} parent=1 // pred_region
      %39 = dma.done [#allocation4], 128
    $region17: #{tpu_custom_call.1} parent=1 // pred_fallthru
      _
    // Predicated region
    $region18: #{tpu_custom_call.1} parent=1 // pred_check
      _
    $region19: #{tpu_custom_call.1} parent=1 // pred_check_branch
      %41 = sbr.rel (0) target = $region21
    $region20: #{tpu_custom_call.1} parent=1 // pred_region
      %42 = dma.done [#allocation7], 256
    $region21: #{tpu_custom_call.1} parent=1 // pred_fallthru
      _
    %p44 = scmp.eq.s32.totalorder 0, 0
    // Predicated region
    $region22: #{tpu_custom_call.1} parent=1 // pred_check
      %p45 = pneg %p44
    $region23: #{tpu_custom_call.1} parent=1 // pred_check_branch
      %47 = sbr.rel (%p45) target = $region25
    $region24: #{tpu_custom_call.1} parent=1 // pred_region
      %vm48 = vcmask 785408
      %49 = vst.msk [vmem:[#allocation2] sm:$0xff] %vm48, 0.0
      %50 = vst.msk [vmem:[#allocation2 + $0x8] sm:$0xff] %vm48, 0.0
    $region25: #{tpu_custom_call.1} parent=1 // pred_fallthru
      _
    %v51 = vld [vmem:[#allocation2] sm:$0xff]
    %v52 = vld [vmem:[#allocation2 + $0x8] sm:$0xff]
    %v53 = vld [vmem:[#allocation3] sm:$0xf]
    %v54 = vld [vmem:[#allocation3 + $0x4] sm:$0xf]
    %v55 = vld [vmem:[#allocation6] sm:$0xf]
    %v56 = vld [vmem:[#allocation6 + $0x4] sm:$0xf]
    %v57 = vld [vmem:[#allocation6 + $0x8] sm:$0xf]
    %v58 = vld [vmem:[#allocation6 + $0xc] sm:$0xf]
    %v61 = vunpack.c.l.b16 %v53
    %v62 = vunpack.c.l.b16 %v54
    %v63 = vpack.c.b16 %v62, %v61
    %v68 = vunpack.c.l.b16 %v55
    %v69 = vunpack.c.l.b16 %v56
    %v70 = vunpack.c.l.b16 %v57
    %v71 = vunpack.c.l.b16 %v58
    %v72 = vpack.c.b16 %v69, %v68
    %v73 = vpack.c.b16 %v71, %v70
    %vm76 = vcmask 261120
    %v78 = vsel %vm76, %v63, 0
    %80 = vmatprep.subr.bf16.mxu0 0
    %81 = vmatpush1.bf16.msra.mxu0 0
    %82 = vmatprep.subr.bf16.mxu0 0
    %83 = vmatpush1.bf16.msra.mxu0 0
    %84 = vmatprep.subr.bf16.mxu0 0
    %85 = vmatpush1.bf16.msra.mxu0 0
    %86 = vmatprep.subr.bf16.mxu0 0
    %87 = vmatpush1.bf16.msra.mxu0 0
    %88 = vmatprep.subr.bf16.mxu0 0
    %89 = vmatpush1.bf16.msra.mxu0 0
    %90 = vmatprep.subr.bf16.mxu0 0
    %91 = vmatpush1.bf16.msra.mxu0 0
    %92 = vmatprep.subr.bf16.mxu0 0
    %93 = vmatpush1.bf16.msra.mxu0 %v73
    %94 = vmatprep.subr.bf16.mxu0 0
    %95 = vmatpush1.bf16.msra.mxu0 %v72
    %96 = vmatprep.subr.bf16.mxu0 0
    %97 = vmatpush2.bf16.msra.mxu0 0
    %98 = vmatprep.subr.bf16.mxu0 0
    %99 = vmatpush2.bf16.msra.mxu0 0
    %100 = vmatprep.subr.bf16.mxu0 0
    %101 = vmatpush2.bf16.msra.mxu0 0
    %102 = vmatprep.subr.bf16.mxu0 0
    %103 = vmatpush2.bf16.msra.mxu0 0
    %104 = vmatprep.subr.bf16.mxu0 0
    %105 = vmatpush2.bf16.msra.mxu0 0
    %106 = vmatprep.subr.bf16.mxu0 0
    %107 = vmatpush2.bf16.msra.mxu0 0
    %108 = vmatprep.subr.bf16.mxu0 0
    %109 = vmatpush2.bf16.msra.mxu0 0
    %110 = vmatprep.subr.bf16.mxu0 0
    %111 = vmatpush2.bf16.msra.mxu0 0
    %112 = vmatprep.mubr.bf16.mxu0 0
    %113 = vmatmul.mubr.bf16.gmra.mxu0 %v78
    %v114 = vpop.f32.mrf.mxu0
    %v115 = vadd.f32 0.0, %v114
    %v116 = vpop.f32.mrf.mxu0
    %v117 = vpop.f32.mrf.mxu0
    %v118 = vadd.f32 0.0, %v117
    %v119 = vpop.f32.mrf.mxu0
    %120 = vdwg.mxu0
    %v121 = vadd.f32 %v51, %v115
    %v122 = vadd.f32 %v52, %v118
    %vm123 = vcmask 785408
    %124 = vst.msk [vmem:[#allocation2] sm:$0xff] %vm123, %v121
    %125 = vst.msk [vmem:[#allocation2 + $0x8] sm:$0xff] %vm123, %v122
    // Predicated region
    $region26: #{tpu_custom_call.1} parent=1 // pred_check
      %p126 = pneg %p44
    $region27: #{tpu_custom_call.1} parent=1 // pred_check_branch
      %128 = sbr.rel (%p126) target = $region29
    $region28: #{tpu_custom_call.1} parent=1 // pred_region
      %v129 = vld [vmem:[#allocation2] sm:$0xff]
      %v130 = vld [vmem:[#allocation2 + $0x8] sm:$0xff]
      %v131 = vld [vmem:[%s2] sm:$0x1]
      %v132 = vunpack.c.l.bf16 %v131
      %v133 = vlaneseq
      %v134 = vshrl.u32 %v133, 7
      %v135 = vsub.s32 0, %v134
      %v136 = vrot.slane %v132, %v135
      %v137 = vadd.f32 %v129, %v136
      %v138 = vadd.f32 %v130, %v136
      %v139 = vpack.c.bf16 %v138, %v137
      %v141 = vunpack.c.l.b16 %v139
      %v142 = vunpack.c.h.b16 %v139
      %v143 = vpack.c.b16 %v141, %v141
      %v144 = vpack.c.b16 %v142, %v142
      %vm147 = vcmask 781312
      %148 = vst.msk [vmem:[#allocation8] sm:$0xf] %vm147, %v143
      %149 = vst.msk [vmem:[#allocation8 + $0x4] sm:$0xf] %vm147, %v144
    $region29: #{tpu_custom_call.1} parent=1 // pred_fallthru
      _
    // Predicated region
    $region30: #{tpu_custom_call.1} parent=1 // pred_check
      _
    $region31: #{tpu_custom_call.1} parent=1 // pred_check_branch
      %151 = sbr.rel (0) target = $region33
    $region32: #{tpu_custom_call.1} parent=1 // pred_region
      %s153 = ssub.s32 128, 128
      %154 = vsyncadd [#allocation5], %s153
      %s155 = sshll.u32 [#allocation8], 4
      %s156 = int_to_ptr.vmem [resolvable:$true] %s155
      %161 = dma.vmem_to_hbm [thread:$0]  %s156, 128, %s3, [#allocation5], 64, 64, 4
    $region33: #{tpu_custom_call.1} parent=1 // pred_fallthru
      _
    // Predicated region
    $region34: #{tpu_custom_call.1} parent=1 // pred_check
      _
    $region35: #{tpu_custom_call.1} parent=1 // pred_check_branch
      %163 = sbr.rel (0) target = $region37
    $region36: #{tpu_custom_call.1} parent=1 // pred_region
      %164 = dma.done [#allocation5], 128
    $region37: #{tpu_custom_call.1} parent=1 // pred_fallthru
      _
    %165 = vsyncpa [#allocation4], 1
    %166 = vsyncpa [#allocation7], 1
    %167 = vsyncpa [#allocation5], 1

</llo_original>
